<compile_context>
chip_gen: v5e
topology: v5e:2x2
jax: 0.10.0
libtpu: 0.0.40
codegen_flags: <defaults>
</compile_context>

<pallas_src>
import functools

import jax
import jax.numpy as jnp
from jax.experimental import pallas as pl
from jax.experimental.pallas import tpu as pltpu


def _control_kernel(xt_ref, u_ref, *, eps):
    # xt_ref: (4, bn) block. Rows 0:2 = positions p, rows 2:4 = velocities v.
    # Batch is on the lane axis (lane-dense). Slicing the Ref is a free view.
    p = xt_ref[0:2, :].astype(jnp.float32)   # (2, bn)
    v = xt_ref[2:4, :].astype(jnp.float32)   # (2, bn)

    # Fused bang-bang switching condition:
    #   (v < 0 & p < v^2/2) | (v > 0 & p < -v^2/2)  ==  (v != 0) & (p < -0.5*v*|v|)
    switch = -0.5 * v * jnp.abs(v)
    cond = jnp.logical_and(v != 0.0, p < switch)
    u = jnp.where(cond, jnp.float32(1.0), jnp.float32(-1.0))

    stop = jnp.logical_and(jnp.abs(p) < eps, jnp.abs(v) < eps)
    u_ref[...] = jnp.where(stop, jnp.float32(0.0), u).astype(u_ref.dtype)


def control(x, eps=0.01, block_n=16384):
    """x: (B, 4) float32 -> u: (B, 2) float32 (bang-bang control)."""
    assert x.ndim == 2 and x.shape[1] == 4, "expected x of shape (B, 4)"
    B = x.shape[0]

    # Lane-dense block size along the batch axis: multiple of 128, capped by block_n.
    bn = min(int(block_n), pl.cdiv(B, 128) * 128)
    B_pad = pl.cdiv(B, bn) * bn

    # Layout plumbing in the wrapper: batch on lanes, the 4 state components on sublanes.
    xt = jnp.transpose(x)                                 # (4, B)
    if B_pad != B:
        xt = jnp.pad(xt, ((0, 0), (0, B_pad - B)))        # zero-pad -> padded u is 0, dropped

    kernel = functools.partial(_control_kernel, eps=float(eps))
    ut = pl.pallas_call(
        kernel,
        out_shape=jax.ShapeDtypeStruct((2, B_pad), jnp.float32),
        grid=(B_pad // bn,),
        in_specs=[pl.BlockSpec((4, bn), lambda i: (0, i))],
        out_specs=pl.BlockSpec((2, bn), lambda i: (0, i)),
        compiler_params=pltpu.CompilerParams(
            dimension_semantics=("parallel",),
        ),
    )(xt)

    return jnp.transpose(ut[:, :B])                       # (B, 2)


def control_ref(x, eps=0.01):
    """Pure-JAX reference mirroring the PyTorch forward."""
    p = x[:, :2]
    v = x[:, 2:]
    cond1 = jnp.logical_and(v < 0.0, p < v ** 2 / 2)
    cond2 = jnp.logical_and(v > 0.0, p < -(v ** 2) / 2)
    conds = jnp.logical_or(cond1, cond2)
    u = jnp.where(conds, 1.0, -1.0)
    uconds = jnp.logical_and(jnp.abs(p) < eps, jnp.abs(v) < eps)
    return jnp.where(uconds, 0.0, u).astype(jnp.float32)


if __name__ == "__main__":
    key = jax.random.PRNGKey(0)
    B = 8
    x = jax.random.normal(key, (B, 4), dtype=jnp.float32)
    # Force a couple of rows into specific regimes so all branches of the
    # control law (u = +1 / -1 / 0) are exercised.
    x = x.at[0, :].set(jnp.array([0.001, -0.002, 0.003, -0.004], jnp.float32))
    x = x.at[1, :].set(jnp.array([0.005, 2.0, 0.002, -1.0], jnp.float32))

    u = control(x, eps=0.01)
    u = jax.block_until_ready(u)

    u_expected = control_ref(x, eps=0.01)
    assert u.shape == (B, 2) and u.dtype == jnp.float32
    assert jnp.array_equal(u, u_expected), (u, u_expected)
    print("KERNEL_OK")
</pallas_src>

<mosaic_0001>
module attributes {stable_mosaic.version = 11 : i64} {
  func.func @_control_kernel(%arg0: i32, %arg1: memref<4x128xf32, #tpu.memory_space<vmem>>, %arg2: memref<2x128xf32, #tpu.memory_space<vmem>>) attributes {dimension_semantics = [#tpu.dimension_semantics<parallel>], iteration_bounds = array<i64: 1>, scalar_prefetch = 0 : i64, scratch_operands = 0 : i64, tpu.core_type = #tpu.core_type<tc>, window_params = [{transform_indices = @transform_0, window_bounds = array<i64: 4, 128>}, {transform_indices = @transform_1, window_bounds = array<i64: 2, 128>}]} {
    %c0 = arith.constant 0 : index
    %c0_0 = arith.constant 0 : index
    %0 = vector.load %arg1[%c0, %c0_0] : memref<4x128xf32, #tpu.memory_space<vmem>>, vector<2x128xf32>
    %c2 = arith.constant 2 : index
    %c0_1 = arith.constant 0 : index
    %1 = vector.load %arg1[%c2, %c0_1] : memref<4x128xf32, #tpu.memory_space<vmem>>, vector<2x128xf32>
    %cst = arith.constant -5.000000e-01 : f32
    %2 = vector.broadcast %cst : f32 to vector<2x128xf32>
    %3 = arith.mulf %2, %1 : vector<2x128xf32>
    %4 = math.absf %1 : vector<2x128xf32>
    %5 = arith.mulf %3, %4 : vector<2x128xf32>
    %cst_2 = arith.constant 0.000000e+00 : f32
    %6 = vector.broadcast %cst_2 : f32 to vector<2x128xf32>
    %7 = arith.cmpf one, %1, %6 : vector<2x128xf32>
    %8 = arith.cmpf olt, %0, %5 : vector<2x128xf32>
    %9 = arith.andi %7, %8 : vector<2x128xi1>
    %cst_3 = arith.constant 1.000000e+00 : f32
    %cst_4 = arith.constant -1.000000e+00 : f32
    %10 = vector.broadcast %cst_3 : f32 to vector<2x128xf32>
    %11 = vector.broadcast %cst_4 : f32 to vector<2x128xf32>
    %12 = arith.select %9, %10, %11 : vector<2x128xi1>, vector<2x128xf32>
    %13 = math.absf %0 : vector<2x128xf32>
    %cst_5 = arith.constant 0.00999999977 : f32
    %14 = vector.broadcast %cst_5 : f32 to vector<2x128xf32>
    %15 = arith.cmpf olt, %13, %14 : vector<2x128xf32>
    %16 = math.absf %1 : vector<2x128xf32>
    %cst_6 = arith.constant 0.00999999977 : f32
    %17 = vector.broadcast %cst_6 : f32 to vector<2x128xf32>
    %18 = arith.cmpf olt, %16, %17 : vector<2x128xf32>
    %19 = arith.andi %15, %18 : vector<2x128xi1>
    %cst_7 = arith.constant 0.000000e+00 : f32
    %20 = vector.broadcast %cst_7 : f32 to vector<2x128xf32>
    %21 = arith.select %19, %20, %12 : vector<2x128xi1>, vector<2x128xf32>
    %c0_8 = arith.constant 0 : index
    %c0_9 = arith.constant 0 : index
    %22 = vector.load %arg2[%c0_8, %c0_9] : memref<2x128xf32, #tpu.memory_space<vmem>>, vector<2x128xf32>
    tpu.vector_store %arg2[%c0_8, %c0_9], %21 {strides = array<i32>} : memref<2x128xf32, #tpu.memory_space<vmem>>, vector<2x128xf32>,
    return
  }
  func.func @transform_0(%arg0: i32) -> (i32, i32) {
    %c0_i32 = arith.constant 0 : i32
    %c0_i32_0 = arith.constant 0 : i32
    return %c0_i32, %arg0 : i32, i32
  }
  func.func @transform_1(%arg0: i32) -> (i32, i32) {
    %c0_i32 = arith.constant 0 : i32
    %c0_i32_0 = arith.constant 0 : i32
    return %c0_i32, %arg0 : i32, i32
  }
}

</mosaic_0001>

<llo_original>
// kernel: tpu_custom_call.1
$region0: #{tpu_custom_call.1}
  #allocation0 [shape = 'u32[]', space=smem, size = 0x4, offset = 0x4, fixed_abs, tag = 'smem constant byte address 0x4 - core index']
  #allocation1 [shape = 'u32[72,128]{1,0:T(1,128)}', space=vmem, size = 0x9000, scoped, tag = 'internal scratch']
  %s0 = inlined_call_operand.hbm [shape: f32[4,128], index: 0, kind: input, shape index: {}]
  %s1 = inlined_call_operand.hbm [shape: f32[2,128], index: 1, kind: output, shape index: {}]
  %s2 = sld [smem:[#allocation0]]
  $region18: #{tpu_custom_call.1} parent=0
    _
  %s4 = ssub.s32 1, %s2
  %s5 = scalar_select 0, %s4, %s2
  $region1: #{tpu_custom_call.1} parent=0
    #allocation2 [shape = 'u8[2048]{0}', space=vmem, size = 0x800, scoped, tag = 'input window, operand 0, single buffered']
    #allocation3 [shape = 's32[1]{0}', space=sflag, size = 0x4, scoped, tag = 'scoped memory for tpu_custom_call.1']
    #allocation4 [shape = 's32[1]{0}', space=sflag, size = 0x4, scoped, tag = 'scoped memory for tpu_custom_call.1']
    #allocation5 [shape = 'u8[1024]{0}', space=vmem, size = 0x400, scoped, tag = 'output window, operand 0, single buffered']
    %6 = vsyncpa [#allocation3], 0
    %7 = vsyncpa [#allocation4], 0
    // Predicated region
    $region2: #{tpu_custom_call.1} parent=1 // pred_check
      _
    $region3: #{tpu_custom_call.1} parent=1 // pred_check_branch
      %9 = sbr.rel (0) target = $region5
    $region4: #{tpu_custom_call.1} parent=1 // pred_region
      %11 = vsyncadd [#allocation3], 0
      %s13 = sshll.u32 %s0, 4
      %s14 = int_to_ptr.hbm [resolvable:$true] %s13
      %s15 = sshll.u32 [#allocation2], 4
      %s16 = int_to_ptr.vmem [resolvable:$true] %s15
      %18 = dma.hbm_to_vmem [thread:$0]  %s14, 64, %s16, [#allocation3]
    $region5: #{tpu_custom_call.1} parent=1 // pred_fallthru
      _
    // Predicated region
    $region6: #{tpu_custom_call.1} parent=1 // pred_check
      _
    $region7: #{tpu_custom_call.1} parent=1 // pred_check_branch
      %20 = sbr.rel (0) target = $region9
    $region8: #{tpu_custom_call.1} parent=1 // pred_region
      %22 = dma.done [#allocation3], 64
    $region9: #{tpu_custom_call.1} parent=1 // pred_fallthru
      _
    %v23 = vld [vmem:[#allocation2] sm:$0x3]
    %v24 = vld [vmem:[#allocation2 + $0x2] sm:$0x3]
    %v25 = vmul.f32 %v24, -0.5
    %v26 = vand.u32 2147483647, %v24
    %v27 = vmul.f32 %v25, %v26
    %vm28 = vcmp.ne.f32.partialorder %v24, 0.0
    %vm29 = vcmp.lt.f32.partialorder %v23, %v27
    %vm30 = vmand %vm28, %vm29
    %v31 = vsel %vm30, 1.0, -1.0
    %v32 = vand.u32 2147483647, %v23
    %vm33 = vcmp.lt.f32.partialorder %v32, 0.01
    %vm34 = vcmp.lt.f32.partialorder %v26, 0.01
    %vm35 = vmand %vm33, %vm34
    %v36 = vsel %vm35, 0.0, %v31
    %37 = vst [vmem:[#allocation5] sm:$0x3] %v36
    // Predicated region
    $region10: #{tpu_custom_call.1} parent=1 // pred_check
      _
    $region11: #{tpu_custom_call.1} parent=1 // pred_check_branch
      %39 = sbr.rel (0) target = $region13
    $region12: #{tpu_custom_call.1} parent=1 // pred_region
      %41 = vsyncadd [#allocation4], 0
      %s43 = sshll.u32 [#allocation5], 4
      %s44 = int_to_ptr.vmem [resolvable:$true] %s43
      %s45 = sshll.u32 %s1, 4
      %s46 = int_to_ptr.hbm [resolvable:$true] %s45
      %48 = dma.vmem_to_hbm [thread:$0]  %s44, 32, %s46, [#allocation4]
    $region13: #{tpu_custom_call.1} parent=1 // pred_fallthru
      _
    // Predicated region
    $region14: #{tpu_custom_call.1} parent=1 // pred_check
      _
    $region15: #{tpu_custom_call.1} parent=1 // pred_check_branch
      %50 = sbr.rel (0) target = $region17
    $region16: #{tpu_custom_call.1} parent=1 // pred_region
      %52 = dma.done [#allocation4], 32
    $region17: #{tpu_custom_call.1} parent=1 // pred_fallthru
      _
    %53 = vsyncpa [#allocation3], 1
    %54 = vsyncpa [#allocation4], 1

</llo_original>
